<compile_context>
chip_gen: v7x
topology: tpu7x:2x2x1
jax: 0.10.0
libtpu: 0.0.40
codegen_flags: <defaults>
</compile_context>

<pallas_src>
import functools

import jax
import jax.numpy as jnp
from jax.experimental import pallas as pl
from jax.experimental.pallas import tpu as pltpu


def _round_up(x, m):
    return (x + m - 1) // m * m


def _cb_softmax_bce_kernel(logits_ref, labels_ref, w_ref, out_ref, acc_ref,
                           *, c_valid, eps, inv_denom):
    """One batch tile of mean(w * BCE(softmax(logits), smoothed_one_hot)).

    logits_ref : [TB, Cpad] (input dtype) VMEM — only streamed operand
    labels_ref : [TB, 1]    int32 VMEM
    w_ref      : [TB, 1]    f32   VMEM   (per-example class-balanced weight)
    out_ref    : [1, 1]     f32   SMEM   (scalar loss, written on last step)
    acc_ref    : [1]        f32   SMEM   scratch accumulator
    """
    i = pl.program_id(0)

    @pl.when(i == 0)
    def _():
        acc_ref[0] = jnp.float32(0.0)

    logits = logits_ref[...].astype(jnp.float32)        # [TB, Cpad]
    labels = labels_ref[...]                            # [TB, 1] int32
    w = w_ref[...]                                      # [TB, 1] f32

    tb, cpad = logits.shape
    col = jax.lax.broadcasted_iota(jnp.int32, (tb, cpad), 1)
    valid = col < c_valid

    # Mask padded class lanes so they do not perturb the softmax.
    logits = jnp.where(valid, logits, jnp.float32(-1e30))

    # Label-smoothed one-hot target, built in-kernel (no [B, C] HBM stream).
    onehot = (col == labels).astype(jnp.float32)
    target = jnp.where(valid, (1.0 - eps) * onehot + (eps / c_valid), 0.0)

    # log-softmax: one exp + one log per element, per-row log / reciprocal.
    m = jnp.max(logits, axis=1, keepdims=True)
    e = jnp.exp(logits - m)
    sum_e = jnp.sum(e, axis=1, keepdims=True)
    lse = m + jnp.log(sum_e)
    log_p = jnp.maximum(logits - lse, -100.0)           # torch BCE log clamp

    inv_sum = pl.reciprocal(sum_e, approx=True)
    inv_sum = inv_sum * (2.0 - sum_e * inv_sum)         # one Newton step
    pred = e * inv_sum
    log_1mp = jnp.maximum(jnp.log(1.0 - pred), -100.0)

    bce = -(target * log_p + (1.0 - target) * log_1mp)
    bce = jnp.where(valid, bce, 0.0)                    # padded lanes -> 0

    acc_ref[0] = acc_ref[0] + jnp.sum(w * bce)

    @pl.when(i == pl.num_programs(0) - 1)
    def _():
        out_ref[0, 0] = acc_ref[0] * jnp.float32(inv_denom)


def cb_loss(logits, labels, *, beta=0.9999, gamma=2.0, epsilon=0.1):
    """JAX/Pallas equivalent of CB_loss(beta, gamma, epsilon)(logits, labels)."""
    B, C = logits.shape
    labels = labels.astype(jnp.int32)

    # ---- tiny O(C) glue: class histogram -> class-balanced weights ----
    samples_per_cls = jnp.zeros((C,), jnp.float32).at[labels].add(
        jnp.ones((B,), jnp.float32))
    effective_num = 1.0 - jnp.power(jnp.float32(beta), samples_per_cls)
    weights = (1.0 - beta) / (effective_num + 1e-8)
    weights = weights / jnp.sum(weights) * C            # sum(weights) == C

    # closed-form per-example weight:
    #   w_i = sum_c weights[c] * target[i, c] = (1-eps)*weights[label_i] + eps
    w = (1.0 - epsilon) * weights[labels] + epsilon     # [B]

    # ---- pad to TPU-friendly shapes (classes -> lanes, batch -> sublanes) ----
    c_pad = _round_up(C, 128)
    bytes_per_row = c_pad * 4
    # ~4 MiB per (double-buffered) logits tile: safe for v7x's 32 MiB scoped VMEM.
    tb = max(8, min(512, (4 * 1024 * 1024 // bytes_per_row) // 8 * 8))
    tb = min(tb, _round_up(B, 8))
    b_pad = _round_up(B, tb)
    num_tiles = b_pad // tb

    logits_p = jnp.zeros((b_pad, c_pad), logits.dtype).at[:B, :C].set(logits)
    labels_p = jnp.zeros((b_pad, 1), jnp.int32).at[:B, 0].set(labels)
    w_p = jnp.zeros((b_pad, 1), jnp.float32).at[:B, 0].set(w)  # padded rows -> 0

    kernel = functools.partial(
        _cb_softmax_bce_kernel,
        c_valid=C, eps=float(epsilon), inv_denom=1.0 / float(B * C))

    out = pl.pallas_call(
        kernel,
        out_shape=jax.ShapeDtypeStruct((1, 1), jnp.float32),
        grid_spec=pltpu.PrefetchScalarGridSpec(
            num_scalar_prefetch=0,
            grid=(num_tiles,),
            in_specs=[
                pl.BlockSpec((tb, c_pad), lambda i: (i, 0)),
                pl.BlockSpec((tb, 1), lambda i: (i, 0)),
                pl.BlockSpec((tb, 1), lambda i: (i, 0)),
            ],
            out_specs=pl.BlockSpec((1, 1), lambda i: (0, 0),
                                   memory_space=pltpu.MemorySpace.SMEM),
            scratch_shapes=[pltpu.SMEM((1,), jnp.float32)],
        ),
        compiler_params=pltpu.CompilerParams(
            dimension_semantics=("arbitrary",),
            vmem_limit_bytes=32 * 1024 * 1024,
        ),
    )(logits_p, labels_p, w_p)
    return out[0, 0]


def _reference_cb_loss(logits, labels, *, beta, gamma, epsilon):
    """Pure-JAX reference (mirrors the PyTorch forward, loss_type='softmax')."""
    logits = logits.astype(jnp.float32)
    B, C = logits.shape
    samples_per_cls = jnp.sum(
        (labels[:, None] == jnp.arange(C, dtype=labels.dtype)[None, :])
        .astype(jnp.float32), axis=0)
    effective_num = 1.0 - jnp.power(jnp.float32(beta), samples_per_cls)
    weights = (1.0 - beta) / (effective_num + 1e-8)
    weights = weights / jnp.sum(weights) * C
    one_hot = jax.nn.one_hot(labels, C, dtype=jnp.float32)
    target = (1.0 - epsilon) * one_hot + epsilon / C
    w = jnp.sum(weights[None, :] * target, axis=1, keepdims=True)
    pred = jax.nn.softmax(logits, axis=1)
    log_p = jnp.maximum(jnp.log(pred), -100.0)
    log_1mp = jnp.maximum(jnp.log(1.0 - pred), -100.0)
    bce = -(target * log_p + (1.0 - target) * log_1mp)
    return jnp.mean(w * bce)


if __name__ == "__main__":
    key = jax.random.PRNGKey(0)
    k1, k2 = jax.random.split(key)

    batch, num_classes = 8, 16
    logits = jax.random.normal(k1, (batch, num_classes), dtype=jnp.float32)
    labels = jax.random.randint(k2, (batch,), 0, num_classes, dtype=jnp.int32)

    beta, gamma, epsilon = 0.9999, 2.0, 0.1

    loss = cb_loss(logits, labels, beta=beta, gamma=gamma, epsilon=epsilon)
    loss = jax.block_until_ready(loss)

    ref = _reference_cb_loss(logits, labels, beta=beta, gamma=gamma, epsilon=epsilon)
    # Kernel uses log-softmax + (Newton-refined) approx reciprocal, so allow a
    # slightly looser tolerance than bit-exact exp->div->log.
    assert jnp.allclose(loss, ref, rtol=1e-3, atol=1e-6), (loss, ref)

    print("KERNEL_OK")
</pallas_src>

<mosaic_0001>
module attributes {stable_mosaic.version = 11 : i64} {
  func.func @_cb_softmax_bce_kernel(%arg0: i32, %arg1: memref<8x128xf32, #tpu.memory_space<vmem>>, %arg2: memref<8x1xi32, #tpu.memory_space<vmem>>, %arg3: memref<8x1xf32, #tpu.memory_space<vmem>>, %arg4: memref<1x1xf32, #tpu.memory_space<smem>>, %arg5: memref<1xf32, #tpu.memory_space<smem>>) attributes {dimension_semantics = [#tpu.dimension_semantics<arbitrary>], iteration_bounds = array<i64: 1>, scalar_prefetch = 0 : i64, scratch_operands = 1 : i64, tpu.core_type = #tpu.core_type<tc>, window_params = [{transform_indices = @transform_0, window_bounds = array<i64: 8, 128>}, {transform_indices = @transform_1, window_bounds = array<i64: 8, 1>}, {transform_indices = @transform_2, window_bounds = array<i64: 8, 1>}, {transform_indices = @transform_3, window_bounds = array<i64: 1, 1>}]} {
    %c0_i32 = arith.constant 0 : i32
    %0 = arith.cmpi eq, %arg0, %c0_i32 : i32
    %1 = arith.extui %0 : i1 to i32
    %c0_i32_0 = arith.constant 0 : i32
    %2 = arith.cmpi ne, %1, %c0_i32_0 : i32
    scf.if %2 {
      %cst_23 = arith.constant 0.000000e+00 : f32
      %c0_24 = arith.constant 0 : index
      %67 = memref.load %arg5[%c0_24] : memref<1xf32, #tpu.memory_space<smem>>
      memref.store %cst_23, %arg5[%c0_24] : memref<1xf32, #tpu.memory_space<smem>>
    } else {
    }
    %c0 = arith.constant 0 : index
    %c0_1 = arith.constant 0 : index
    %3 = vector.load %arg1[%c0, %c0_1] : memref<8x128xf32, #tpu.memory_space<vmem>>, vector<8x128xf32>
    %c0_2 = arith.constant 0 : index
    %c0_3 = arith.constant 0 : index
    %4 = vector.load %arg2[%c0_2, %c0_3] : memref<8x1xi32, #tpu.memory_space<vmem>>, vector<8x1xi32>
    %c0_4 = arith.constant 0 : index
    %c0_5 = arith.constant 0 : index
    %5 = vector.load %arg3[%c0_4, %c0_5] : memref<8x1xf32, #tpu.memory_space<vmem>>, vector<8x1xf32>
    %6 = tpu.iota {dimensions = array<i32: 1>} : vector<8x128xi32>
    %c16_i32 = arith.constant 16 : i32
    %7 = vector.broadcast %c16_i32 : i32 to vector<8x128xi32>
    %8 = arith.cmpi slt, %6, %7 : vector<8x128xi32>
    %cst = arith.constant -1.000000e+30 : f32
    %9 = vector.broadcast %cst : f32 to vector<8x128xf32>
    %10 = arith.select %8, %3, %9 : vector<8x128xi1>, vector<8x128xf32>
    %11 = vector.broadcast %4 : vector<8x1xi32> to vector<8x128xi32>
    %12 = arith.cmpi eq, %6, %11 : vector<8x128xi32>
    %13 = arith.extui %12 : vector<8x128xi1> to vector<8x128xi32>
    %14 = arith.sitofp %13 : vector<8x128xi32> to vector<8x128xf32>
    %cst_6 = arith.constant 0.899999976 : f32
    %15 = vector.broadcast %cst_6 : f32 to vector<8x128xf32>
    %16 = arith.mulf %15, %14 : vector<8x128xf32>
    %cst_7 = arith.constant 6.250000e-03 : f32
    %17 = vector.broadcast %cst_7 : f32 to vector<8x128xf32>
    %18 = arith.addf %16, %17 : vector<8x128xf32>
    %cst_8 = arith.constant 0.000000e+00 : f32
    %19 = vector.broadcast %cst_8 : f32 to vector<8x128xf32>
    %20 = arith.select %8, %18, %19 : vector<8x128xi1>, vector<8x128xf32>
    %cst_9 = arith.constant dense<0xFF800000> : vector<8xf32>
    %21 = vector.multi_reduction <maximumf>, %10, %cst_9 [1] : vector<8x128xf32> to vector<8xf32>
    %22 = vector.shape_cast %21 : vector<8xf32> to vector<8x1xf32>
    %23 = vector.broadcast %22 : vector<8x1xf32> to vector<8x128xf32>
    %24 = arith.subf %10, %23 : vector<8x128xf32>
    %25 = math.exp %24 : vector<8x128xf32>
    %cst_10 = arith.constant dense<0.000000e+00> : vector<8xf32>
    %26 = vector.multi_reduction <add>, %25, %cst_10 [1] : vector<8x128xf32> to vector<8xf32>
    %27 = vector.shape_cast %26 : vector<8xf32> to vector<8x1xf32>
    %28 = math.log %27 : vector<8x1xf32>
    %29 = arith.addf %22, %28 : vector<8x1xf32>
    %30 = vector.broadcast %29 : vector<8x1xf32> to vector<8x128xf32>
    %31 = arith.subf %10, %30 : vector<8x128xf32>
    %cst_11 = arith.constant -1.000000e+02 : f32
    %32 = vector.broadcast %cst_11 : f32 to vector<8x128xf32>
    %33 = arith.maximumf %31, %32 : vector<8x128xf32>
    %34 = tpu.reciprocal %27 {approx = true} : vector<8x1xf32> -> vector<8x1xf32>
    %35 = arith.mulf %27, %34 : vector<8x1xf32>
    %cst_12 = arith.constant 2.000000e+00 : f32
    %36 = vector.broadcast %cst_12 : f32 to vector<8x1xf32>
    %37 = arith.subf %36, %35 : vector<8x1xf32>
    %38 = arith.mulf %34, %37 : vector<8x1xf32>
    %39 = vector.broadcast %38 : vector<8x1xf32> to vector<8x128xf32>
    %40 = arith.mulf %25, %39 : vector<8x128xf32>
    %cst_13 = arith.constant 1.000000e+00 : f32
    %41 = vector.broadcast %cst_13 : f32 to vector<8x128xf32>
    %42 = arith.subf %41, %40 : vector<8x128xf32>
    %43 = math.log %42 : vector<8x128xf32>
    %cst_14 = arith.constant -1.000000e+02 : f32
    %44 = vector.broadcast %cst_14 : f32 to vector<8x128xf32>
    %45 = arith.maximumf %43, %44 : vector<8x128xf32>
    %46 = arith.mulf %20, %33 : vector<8x128xf32>
    %cst_15 = arith.constant 1.000000e+00 : f32
    %47 = vector.broadcast %cst_15 : f32 to vector<8x128xf32>
    %48 = arith.subf %47, %20 : vector<8x128xf32>
    %49 = arith.mulf %48, %45 : vector<8x128xf32>
    %50 = arith.addf %46, %49 : vector<8x128xf32>
    %cst_16 = arith.constant 0.000000e+00 : f32
    %51 = vector.broadcast %cst_16 : f32 to vector<8x128xf32>
    %52 = arith.subf %51, %50 : vector<8x128xf32>
    %cst_17 = arith.constant 0.000000e+00 : f32
    %53 = vector.broadcast %cst_17 : f32 to vector<8x128xf32>
    %54 = arith.select %8, %52, %53 : vector<8x128xi1>, vector<8x128xf32>
    %c0_18 = arith.constant 0 : index
    %55 = memref.load %arg5[%c0_18] : memref<1xf32, #tpu.memory_space<smem>>
    %56 = vector.broadcast %5 : vector<8x1xf32> to vector<8x128xf32>
    %57 = arith.mulf %56, %54 : vector<8x128xf32>
    %58 = vector.shape_cast %57 : vector<8x128xf32> to vector<1x8x128xf32>
    %cst_19 = arith.constant dense<0.000000e+00> : vector<1xf32>
    %59 = vector.multi_reduction <add>, %58, %cst_19 [1, 2] : vector<1x8x128xf32> to vector<1xf32>
    %60 = vector.shape_cast %59 : vector<1xf32> to vector<1x1x1xf32>
    %61 = vector.extract %60[0, 0, 0] : f32 from vector<1x1x1xf32>
    %62 = arith.addf %55, %61 : f32
    %c0_20 = arith.constant 0 : index
    %63 = memref.load %arg5[%c0_20] : memref<1xf32, #tpu.memory_space<smem>>
    memref.store %62, %arg5[%c0_20] : memref<1xf32, #tpu.memory_space<smem>>
    %c0_i32_21 = arith.constant 0 : i32
    %64 = arith.cmpi eq, %arg0, %c0_i32_21 : i32
    %65 = arith.extui %64 : i1 to i32
    %c0_i32_22 = arith.constant 0 : i32
    %66 = arith.cmpi ne, %65, %c0_i32_22 : i32
    scf.if %66 {
      %c0_23 = arith.constant 0 : index
      %67 = memref.load %arg5[%c0_23] : memref<1xf32, #tpu.memory_space<smem>>
      %cst_24 = arith.constant 7.812500e-03 : f32
      %68 = arith.mulf %67, %cst_24 : f32
      %c0_25 = arith.constant 0 : index
      %c0_26 = arith.constant 0 : index
      %69 = memref.load %arg4[%c0_25, %c0_26] : memref<1x1xf32, #tpu.memory_space<smem>>
      memref.store %68, %arg4[%c0_25, %c0_26] : memref<1x1xf32, #tpu.memory_space<smem>>
    } else {
    }
    return
  }
  func.func @transform_0(%arg0: i32) -> (i32, i32) {
    %c0_i32 = arith.constant 0 : i32
    %c0_i32_0 = arith.constant 0 : i32
    return %arg0, %c0_i32 : i32, i32
  }
  func.func @transform_1(%arg0: i32) -> (i32, i32) {
    %c0_i32 = arith.constant 0 : i32
    %c0_i32_0 = arith.constant 0 : i32
    return %arg0, %c0_i32 : i32, i32
  }
  func.func @transform_2(%arg0: i32) -> (i32, i32) {
    %c0_i32 = arith.constant 0 : i32
    %c0_i32_0 = arith.constant 0 : i32
    return %arg0, %c0_i32 : i32, i32
  }
  func.func @transform_3(%arg0: i32) -> (i32, i32) {
    %c0_i32 = arith.constant 0 : i32
    %c0_i32_0 = arith.constant 0 : i32
    %c0_i32_1 = arith.constant 0 : i32
    return %c0_i32, %c0_i32_0 : i32, i32
  }
}

</mosaic_0001>

<llo_original>
// kernel: tpu_custom_call.1
$region0: #{tpu_custom_call.1}
  #allocation0 [shape = 'u32[]', space=smem, size = 0x4, offset = 0x4, fixed_abs, tag = 'smem constant byte address 0x4 - core index']
  #allocation1 [shape = 'u32[144,128]{1,0:T(1,128)}', space=vmem, size = 0x12000, scoped, tag = 'internal scratch']
  #allocation2 [shape = 'f32[1]{0:T(128)}', space=smem, size = 0x200, scoped, tag = 'scratch operand']
  %s0 = inlined_call_operand.vmem [shape: f32[8,128], index: 0, kind: input, shape index: {}]
  %s1 = inlined_call_operand.vmem [shape: s32[8,1], index: 1, kind: input, shape index: {}]
  %s2 = inlined_call_operand.vmem [shape: f32[8,1], index: 2, kind: input, shape index: {}]
  %s3 = inlined_call_operand.hbm [shape: f32[1,1], index: 3, kind: output, shape index: {}]
  %s4 = sld [smem:[#allocation0]]
  $region30: #{tpu_custom_call.1} parent=0
    _
  %s6 = ssub.s32 1, %s4
  %s7 = scalar_select 0, %s6, %s4
  $region1: #{tpu_custom_call.1} parent=0
    #allocation3 [shape = 'u8[512]{0}', space=smem, size = 0x200, scoped, tag = 'output window, operand 0, single buffered']
    #allocation4 [shape = 's32[1]{0}', space=sflag, size = 0x4, scoped, tag = 'scoped memory for tpu_custom_call.1']
    %8 = vsyncpa [#allocation4], 0
    // Predicated region
    $region2: #{tpu_custom_call.1} parent=1 // pred_check
      _
    $region3: #{tpu_custom_call.1} parent=1 // pred_check_branch
      %10 = sbr.rel (0) target = $region5
    $region4: #{tpu_custom_call.1} parent=1 // pred_region
      _
    $region5: #{tpu_custom_call.1} parent=1 // pred_fallthru
      _
    // Predicated region
    $region6: #{tpu_custom_call.1} parent=1 // pred_check
      _
    $region7: #{tpu_custom_call.1} parent=1 // pred_check_branch
      %12 = sbr.rel (0) target = $region9
    $region8: #{tpu_custom_call.1} parent=1 // pred_region
      _
    $region9: #{tpu_custom_call.1} parent=1 // pred_fallthru
      _
    // Predicated region
    $region10: #{tpu_custom_call.1} parent=1 // pred_check
      _
    $region11: #{tpu_custom_call.1} parent=1 // pred_check_branch
      %14 = sbr.rel (0) target = $region13
    $region12: #{tpu_custom_call.1} parent=1 // pred_region
      _
    $region13: #{tpu_custom_call.1} parent=1 // pred_fallthru
      _
    %p15 = scmp.eq.s32.totalorder 0, 0
    // Predicated region
    $region14: #{tpu_custom_call.1} parent=1 // pred_check
      %p16 = pneg %p15
    $region15: #{tpu_custom_call.1} parent=1 // pred_check_branch
      %18 = sbr.rel (%p16) target = $region17
    $region16: #{tpu_custom_call.1} parent=1 // pred_region
      %s19 = scalar_lea.smem [#allocation2], 0
      %20 = sst [smem:[%s19]] 0.0
    $region17: #{tpu_custom_call.1} parent=1 // pred_fallthru
      _
    %v21 = vld [vmem:[%s0] sm:$0xff]
    %v22 = vld [vmem:[%s1] sm:$0xff]
    %v23 = vld [vmem:[%s2] sm:$0xff]
    %v24 = vlaneseq
    %v25 = vand.u32 %v24, 127
    %vm26 = vcmp.lt.s32.totalorder %v25, 16
    %v27 = vsel %vm26, %v21, -1e+30
    %28 = vset.pattern.permute.xlu0 0
    %29 = vperm.xlu0 %28, %v22
    %v30 = vpop.permute.xlu0 %29
    %vm31 = vcmp.eq.s32.totalorder %v25, %v30
    %v32 = vsel %vm31, 1, 0
    %v33 = vcvt.s32.f32 %v32
    %v34 = vmul.f32 %v33, 0.9
    %v35 = vadd.f32 %v34, 0.00625
    %v36 = vsel %vm26, %v35, 0.0
    %37 = vmax.xlane.f32.xlu0 %v27
    %v38 = vpop.xlane.xlu0 %37
    %v39 = vsub.f32 %v27, %v38
    %v40 = vmul.f32 %v39, 1.442695
    %v41 = vpow.pop %v40
    %42 = vadd.xlane.f32.xlu0 %v41
    %v43 = vpop.xlane.xlu0 %42
    %v44 = vlog2.pop %v43
    %v45 = vmul.f32 %v44, 0.6931472
    %v46 = vadd.f32 %v38, %v45
    %v47 = vsub.f32 %v27, %v46
    %v48 = vmax.f32 %v47, -100.0
    %v49 = vrcp.pop %v43
    %v50 = vmul.f32 %v43, %v49
    %v51 = vsub.f32 2.0, %v50
    %v52 = vmul.f32 %v49, %v51
    %v53 = vmul.f32 %v41, %v52
    %v54 = vsub.f32 1.0, %v53
    %v55 = vlog2.pop %v54
    %v56 = vmul.f32 %v55, 0.6931472
    %v57 = vmax.f32 %v56, -100.0
    %v58 = vmul.f32 %v36, %v48
    %v59 = vsub.f32 1.0, %v36
    %v60 = vmul.f32 %v59, %v57
    %v61 = vadd.f32 %v58, %v60
    %v62 = vsub.f32 0.0, %v61
    %v63 = vsel %vm26, %v62, 0.0
    %s64 = sld [smem:[#allocation2]]
    %66 = vset.pattern.permute.xlu0 0
    %67 = vperm.xlu0 %66, %v23
    %v68 = vpop.permute.xlu0 %67
    %v70 = vmul.f32 %v68, %v63
    %71 = vadd.xlane.f32.xlu0 %v70
    %v72 = vpop.xlane.xlu0 %71
    %v73 = vrot.slane %v72, 4
    %v74 = vadd.f32 %v72, %v73
    %v75 = vrot.slane %v74, 2
    %v76 = vadd.f32 %v74, %v75
    %v77 = vrot.slane %v76, 1
    %v78 = vadd.f32 %v76, %v77
    %s79 = vtos %v78
    %s80 = sadd.f32 %s64, %s79
    %s81 = scalar_lea.smem [#allocation2], 0
    %82 = sst [smem:[%s81]] %s80
    // Predicated region
    $region18: #{tpu_custom_call.1} parent=1 // pred_check
      %p83 = pneg %p15
    $region19: #{tpu_custom_call.1} parent=1 // pred_check_branch
      %85 = sbr.rel (%p83) target = $region21
    $region20: #{tpu_custom_call.1} parent=1 // pred_region
      %s86 = sld [smem:[#allocation2]]
      %s87 = smul.f32 %s86, 0.0078125
      %s88 = scalar_lea.smem [#allocation3], 0
      %89 = sst [smem:[%s88]] %s87
    $region21: #{tpu_custom_call.1} parent=1 // pred_fallthru
      _
    // Predicated region
    $region22: #{tpu_custom_call.1} parent=1 // pred_check
      _
    $region23: #{tpu_custom_call.1} parent=1 // pred_check_branch
      %91 = sbr.rel (0) target = $region25
    $region24: #{tpu_custom_call.1} parent=1 // pred_region
      %s93 = ssub.s32 16, 16
      %94 = vsyncadd [#allocation4], %s93
      %97 = dma.smem_to_hbm [#allocation3], 16, %s3, [#allocation4]
    $region25: #{tpu_custom_call.1} parent=1 // pred_fallthru
      _
    // Predicated region
    $region26: #{tpu_custom_call.1} parent=1 // pred_check
      _
    $region27: #{tpu_custom_call.1} parent=1 // pred_check_branch
      %99 = sbr.rel (0) target = $region29
    $region28: #{tpu_custom_call.1} parent=1 // pred_region
      %100 = dma.done [#allocation4], 16
    $region29: #{tpu_custom_call.1} parent=1 // pred_fallthru
      _
    %101 = sfence
    %102 = vsyncpa [#allocation4], 1

</llo_original>
